<compile_context>
chip_gen: v7x
topology: tpu7x:2x2x1
jax: 0.10.0
libtpu: 0.0.40
codegen_flags: <defaults>
</compile_context>

<pallas_src>
import math

import jax
import jax.numpy as jnp
from jax.experimental import pallas as pl
from jax.experimental.pallas import tpu as pltpu


def _round_up(x: int, m: int) -> int:
    return ((x + m - 1) // m) * m


def _invariant_spec(block_shape):
    """BlockSpec for a grid-invariant operand; single-buffered when supported."""
    index_map = lambda i, j: (0,) * len(block_shape)
    try:
        return pl.BlockSpec(block_shape, index_map, pipeline_mode=pl.Buffered(1))
    except Exception:  # older JAX without pipeline_mode / Buffered
        return pl.BlockSpec(block_shape, index_map)


def _device_tile_defaults():
    """(tm, tv, vmem_limit_bytes) picked from the device's VMEM capacity."""
    try:
        vmem_bytes = int(pltpu.get_tpu_info().vmem_capacity_bytes)
    except Exception:
        vmem_bytes = 64 * 1024 * 1024            # conservative (v7x-sized)
    if vmem_bytes >= 100 * 1024 * 1024:          # v5e / v6e: 128 MiB per core
        return 1024, 2048, int(vmem_bytes * 0.85)
    # v7x: 64 MiB per core; smaller row tile also leaves >=2 row tiles for the
    # two TensorCores at moderate M.
    return 512, 2048, int(vmem_bytes * 0.80)


def _make_mlm_head_kernel(eps: float):
    inv_sqrt2 = 1.0 / math.sqrt(2.0)
    # contract dim 1 of LHS with dim 1 of RHS == x @ W^T for PyTorch Linear
    dn_t = (((1,), (1,)), ((), ()))

    def kernel(x_ref, w1_ref, b1_ref, g_ref, beta_ref, wd_ref, bd_ref,
               o_ref, t_ref):
        # ---- transform: depends only on the row tile, so compute it once per
        # row tile (first vocab step) and keep it resident in VMEM scratch. ----
        @pl.when(pl.program_id(1) == 0)
        def _():
            # dense H->H on the MXU, native operand dtype, f32 accumulation
            h = jax.lax.dot_general(x_ref[...], w1_ref[...],
                                    dimension_numbers=dn_t,
                                    preferred_element_type=jnp.float32)
            h = h + b1_ref[...].astype(jnp.float32)
            # exact (erf-based) GELU -- matches transformers' 'gelu'
            h = 0.5 * h * (1.0 + jax.lax.erf(h * inv_sqrt2))
            # LayerNorm over the hidden (lane) axis, f32 math
            mean = jnp.mean(h, axis=-1, keepdims=True)
            c = h - mean
            var = jnp.mean(c * c, axis=-1, keepdims=True)
            hn = c * jax.lax.rsqrt(var + eps)
            t = hn * g_ref[...].astype(jnp.float32) + beta_ref[...].astype(jnp.float32)
            # down-cast ONCE to the decoder MXU input dtype (scratch dtype)
            t_ref[...] = t.astype(t_ref.dtype)

        # ---- decoder: scores = transform @ Wd^T + bias, per vocab tile ----
        scores = jax.lax.dot_general(t_ref[...], wd_ref[...],
                                     dimension_numbers=dn_t,
                                     preferred_element_type=jnp.float32)
        scores = scores + bd_ref[...].astype(jnp.float32)
        o_ref[...] = scores.astype(o_ref.dtype)

    return kernel


def bert_only_mlm_head(hidden_states, w1, b1, gamma, beta, wd, bd,
                       eps=1e-12, tm=None, tv=None, vmem_limit_bytes=None,
                       compute_dtype=None):
    """BertOnlyMLMHead forward.

    hidden_states: [..., H]
    w1: [H, H], b1: [H]          -- transform dense (PyTorch Linear layout)
    gamma, beta: [H]             -- transform LayerNorm
    wd: [V, H], bd: [V]          -- decoder Linear (no-bias weight) + tied bias
    compute_dtype: optional dtype (e.g. jnp.bfloat16) for the MXU operands.
    Returns prediction scores [..., V] in hidden_states.dtype.
    """
    orig_shape = hidden_states.shape
    H = orig_shape[-1]
    V = wd.shape[0]

    d_tm, d_tv, d_vmem = _device_tile_defaults()
    tm = int(tm) if tm is not None else d_tm
    tv = int(tv) if tv is not None else d_tv
    vmem_limit_bytes = (int(vmem_limit_bytes) if vmem_limit_bytes is not None
                        else d_vmem)

    x2d = hidden_states.reshape(-1, H)
    M = x2d.shape[0]

    if compute_dtype is not None:
        # bf16 MXU path (f32 accumulation via preferred_element_type)
        x2d = x2d.astype(compute_dtype)
        w1 = w1.astype(compute_dtype)
        wd = wd.astype(compute_dtype)

    # ---- tile selection (clamped for small inputs; multiples of 8 / 128) ----
    tm_eff = max(8, min(tm, _round_up(M, 8)))
    Mp = _round_up(M, tm_eff)
    if V >= tv:
        tv_eff = tv
        Vp = _round_up(V, tv_eff)
    else:
        tv_eff = V          # block == full dim is always legal
        Vp = V

    # ---- pad to tile multiples (sliced off at the end) ----
    if Mp != M:
        x2d = jnp.pad(x2d, ((0, Mp - M), (0, 0)))
    if Vp != V:
        wd = jnp.pad(wd, ((0, Vp - V), (0, 0)))          # [Vp, H]
        bd_p = jnp.pad(bd, (0, Vp - V)).reshape(1, Vp)
    else:
        bd_p = bd.reshape(1, Vp)
    b1_2d = b1.reshape(1, H)
    g2d = gamma.reshape(1, H)
    beta2d = beta.reshape(1, H)

    kernel = _make_mlm_head_kernel(float(eps))

    row_tiles = Mp // tm_eff
    vocab_tiles = Vp // tv_eff
    itemsize = jnp.dtype(x2d.dtype).itemsize
    cost = pl.CostEstimate(
        flops=2 * M * H * H + 2 * M * H * V,
        transcendentals=M * H,
        bytes_accessed=itemsize * (Mp * H + H * H + 4 * H
                                   + row_tiles * H * Vp + Mp * Vp),
    )

    out = pl.pallas_call(
        kernel,
        out_shape=jax.ShapeDtypeStruct((Mp, Vp), hidden_states.dtype),
        grid_spec=pltpu.PrefetchScalarGridSpec(
            num_scalar_prefetch=0,
            grid=(row_tiles, vocab_tiles),
            in_specs=[
                pl.BlockSpec((tm_eff, H), lambda i, j: (i, 0)),   # x rows
                _invariant_spec((H, H)),                          # W1 [out,in], single-buffered
                _invariant_spec((1, H)),                          # b1
                _invariant_spec((1, H)),                          # LN gamma
                _invariant_spec((1, H)),                          # LN beta
                pl.BlockSpec((tv_eff, H), lambda i, j: (j, 0)),   # Wd vocab tile [tv, H]
                pl.BlockSpec((1, tv_eff), lambda i, j: (0, j)),   # decoder bias tile
            ],
            out_specs=pl.BlockSpec((tm_eff, tv_eff), lambda i, j: (i, j)),
            # transform output held in the decoder MXU input dtype
            scratch_shapes=[pltpu.VMEM((tm_eff, H), wd.dtype)],
        ),
        compiler_params=pltpu.CompilerParams(
            dimension_semantics=("parallel", "arbitrary"),
            vmem_limit_bytes=vmem_limit_bytes,
        ),
        cost_estimate=cost,
    )(x2d, w1, b1_2d, g2d, beta2d, wd, bd_p)

    out = out[:M, :V]
    return out.reshape(orig_shape[:-1] + (V,))


if __name__ == "__main__":
    # Small config consistent with the module: hidden_size=32, vocab_size=64,
    # batch=2, seq=8.
    batch, seq, hidden, vocab = 2, 8, 32, 64
    eps = 1e-12

    key = jax.random.PRNGKey(0)
    k_x, k_w1, k_b1, k_g, k_beta, k_wd, k_bd = jax.random.split(key, 7)

    x = jax.random.normal(k_x, (batch, seq, hidden), dtype=jnp.float32)
    w1 = jax.random.normal(k_w1, (hidden, hidden), dtype=jnp.float32) * 0.02
    b1 = jax.random.normal(k_b1, (hidden,), dtype=jnp.float32) * 0.02
    gamma = 1.0 + 0.1 * jax.random.normal(k_g, (hidden,), dtype=jnp.float32)
    beta = 0.1 * jax.random.normal(k_beta, (hidden,), dtype=jnp.float32)
    wd = jax.random.normal(k_wd, (vocab, hidden), dtype=jnp.float32) * 0.02
    bd = jax.random.normal(k_bd, (vocab,), dtype=jnp.float32) * 0.02

    out = bert_only_mlm_head(x, w1, b1, gamma, beta, wd, bd, eps=eps)
    out = jax.block_until_ready(out)

    # Pure-JAX reference: dense -> gelu -> layernorm -> decoder (+ bias)
    h_ref = jnp.einsum("bsh,oh->bso", x, w1) + b1
    h_ref = 0.5 * h_ref * (1.0 + jax.lax.erf(h_ref / jnp.sqrt(2.0)))
    mu = jnp.mean(h_ref, axis=-1, keepdims=True)
    var = jnp.mean((h_ref - mu) ** 2, axis=-1, keepdims=True)
    t_ref = (h_ref - mu) * jax.lax.rsqrt(var + eps) * gamma + beta
    ref = jnp.einsum("bsh,vh->bsv", t_ref, wd) + bd

    assert out.shape == (batch, seq, vocab)
    assert jnp.allclose(out, ref, atol=1e-4, rtol=1e-4)
    print("KERNEL_OK")
</pallas_src>

<mosaic_0001>
module attributes {stable_mosaic.version = 11 : i64} {
  func.func @kernel(%arg0: i32, %arg1: i32, %arg2: memref<16x32xf32, #tpu.memory_space<vmem>>, %arg3: memref<32x32xf32, #tpu.memory_space<vmem>>, %arg4: memref<1x32xf32, #tpu.memory_space<vmem>>, %arg5: memref<1x32xf32, #tpu.memory_space<vmem>>, %arg6: memref<1x32xf32, #tpu.memory_space<vmem>>, %arg7: memref<64x32xf32, #tpu.memory_space<vmem>>, %arg8: memref<1x64xf32, #tpu.memory_space<vmem>>, %arg9: memref<16x64xf32, #tpu.memory_space<vmem>>, %arg10: memref<16x32xf32, #tpu.memory_space<vmem>>) attributes {dimension_semantics = [#tpu.dimension_semantics<parallel>, #tpu.dimension_semantics<arbitrary>], iteration_bounds = array<i64: 1, 1>, scalar_prefetch = 0 : i64, scratch_operands = 1 : i64, tpu.core_type = #tpu.core_type<tc>, window_params = [{transform_indices = @transform_0, window_bounds = array<i64: 16, 32>}, {pipeline_mode = #tpu.pipeline_mode<synchronous>, transform_indices = @transform_1, window_bounds = array<i64: 32, 32>}, {pipeline_mode = #tpu.pipeline_mode<synchronous>, transform_indices = @transform_2, window_bounds = array<i64: 1, 32>}, {pipeline_mode = #tpu.pipeline_mode<synchronous>, transform_indices = @transform_3, window_bounds = array<i64: 1, 32>}, {pipeline_mode = #tpu.pipeline_mode<synchronous>, transform_indices = @transform_4, window_bounds = array<i64: 1, 32>}, {transform_indices = @transform_5, window_bounds = array<i64: 64, 32>}, {transform_indices = @transform_6, window_bounds = array<i64: 1, 64>}, {transform_indices = @transform_7, window_bounds = array<i64: 16, 64>}]} {
    %c0_i32 = arith.constant 0 : i32
    %0 = arith.cmpi eq, %arg1, %c0_i32 : i32
    %1 = arith.extui %0 : i1 to i32
    %c0_i32_0 = arith.constant 0 : i32
    %2 = arith.cmpi ne, %1, %c0_i32_0 : i32
    scf.if %2 {
      %c0_8 = arith.constant 0 : index
      %c0_9 = arith.constant 0 : index
      %10 = vector.load %arg2[%c0_8, %c0_9] : memref<16x32xf32, #tpu.memory_space<vmem>>, vector<16x32xf32>
      %c0_10 = arith.constant 0 : index
      %c0_11 = arith.constant 0 : index
      %11 = vector.load %arg3[%c0_10, %c0_11] : memref<32x32xf32, #tpu.memory_space<vmem>>, vector<32x32xf32>
      %cst_12 = arith.constant dense<0.000000e+00> : vector<16x32xf32>
      %12 = tpu.matmul %10, %11, %cst_12 {dimension_numbers = #tpu.dot_dimension_numbers<[1], [1], [0], [0], [0, 0, 1, 0], [], []>} : vector<16x32xf32>, vector<32x32xf32>, vector<16x32xf32> -> vector<16x32xf32>
      %c0_13 = arith.constant 0 : index
      %c0_14 = arith.constant 0 : index
      %13 = vector.load %arg4[%c0_13, %c0_14] : memref<1x32xf32, #tpu.memory_space<vmem>>, vector<1x32xf32>
      %14 = vector.broadcast %13 : vector<1x32xf32> to vector<16x32xf32>
      %15 = arith.addf %12, %14 : vector<16x32xf32>
      %cst_15 = arith.constant 5.000000e-01 : f32
      %16 = vector.broadcast %cst_15 : f32 to vector<16x32xf32>
      %17 = arith.mulf %16, %15 : vector<16x32xf32>
      %cst_16 = arith.constant 0.707106769 : f32
      %18 = vector.broadcast %cst_16 : f32 to vector<16x32xf32>
      %19 = arith.mulf %15, %18 : vector<16x32xf32>
      %20 = math.erf %19 : vector<16x32xf32>
      %cst_17 = arith.constant 1.000000e+00 : f32
      %21 = vector.broadcast %cst_17 : f32 to vector<16x32xf32>
      %22 = arith.addf %21, %20 : vector<16x32xf32>
      %23 = arith.mulf %17, %22 : vector<16x32xf32>
      %cst_18 = arith.constant dense<0.000000e+00> : vector<16xf32>
      %24 = vector.multi_reduction <add>, %23, %cst_18 [1] : vector<16x32xf32> to vector<16xf32>
      %25 = vector.shape_cast %24 : vector<16xf32> to vector<16x1xf32>
      %cst_19 = arith.constant 3.200000e+01 : f32
      %26 = vector.broadcast %cst_19 : f32 to vector<16x1xf32>
      %27 = arith.divf %25, %26 : vector<16x1xf32>
      %28 = vector.broadcast %27 : vector<16x1xf32> to vector<16x32xf32>
      %29 = arith.subf %23, %28 : vector<16x32xf32>
      %30 = arith.mulf %29, %29 : vector<16x32xf32>
      %cst_20 = arith.constant dense<0.000000e+00> : vector<16xf32>
      %31 = vector.multi_reduction <add>, %30, %cst_20 [1] : vector<16x32xf32> to vector<16xf32>
      %32 = vector.shape_cast %31 : vector<16xf32> to vector<16x1xf32>
      %cst_21 = arith.constant 3.200000e+01 : f32
      %33 = vector.broadcast %cst_21 : f32 to vector<16x1xf32>
      %34 = arith.divf %32, %33 : vector<16x1xf32>
      %cst_22 = arith.constant 9.99999996E-13 : f32
      %35 = vector.broadcast %cst_22 : f32 to vector<16x1xf32>
      %36 = arith.addf %34, %35 : vector<16x1xf32>
      %37 = math.rsqrt %36 : vector<16x1xf32>
      %38 = vector.broadcast %37 : vector<16x1xf32> to vector<16x32xf32>
      %39 = arith.mulf %29, %38 : vector<16x32xf32>
      %c0_23 = arith.constant 0 : index
      %c0_24 = arith.constant 0 : index
      %40 = vector.load %arg5[%c0_23, %c0_24] : memref<1x32xf32, #tpu.memory_space<vmem>>, vector<1x32xf32>
      %41 = vector.broadcast %40 : vector<1x32xf32> to vector<16x32xf32>
      %42 = arith.mulf %39, %41 : vector<16x32xf32>
      %c0_25 = arith.constant 0 : index
      %c0_26 = arith.constant 0 : index
      %43 = vector.load %arg6[%c0_25, %c0_26] : memref<1x32xf32, #tpu.memory_space<vmem>>, vector<1x32xf32>
      %44 = vector.broadcast %43 : vector<1x32xf32> to vector<16x32xf32>
      %45 = arith.addf %42, %44 : vector<16x32xf32>
      %c0_27 = arith.constant 0 : index
      %c0_28 = arith.constant 0 : index
      %46 = vector.load %arg10[%c0_27, %c0_28] : memref<16x32xf32, #tpu.memory_space<vmem>>, vector<16x32xf32>
      tpu.vector_store %arg10[%c0_27, %c0_28], %45 {strides = array<i32>} : memref<16x32xf32, #tpu.memory_space<vmem>>, vector<16x32xf32>,
    } else {
    }
    %c0 = arith.constant 0 : index
    %c0_1 = arith.constant 0 : index
    %3 = vector.load %arg10[%c0, %c0_1] : memref<16x32xf32, #tpu.memory_space<vmem>>, vector<16x32xf32>
    %c0_2 = arith.constant 0 : index
    %c0_3 = arith.constant 0 : index
    %4 = vector.load %arg7[%c0_2, %c0_3] : memref<64x32xf32, #tpu.memory_space<vmem>>, vector<64x32xf32>
    %cst = arith.constant dense<0.000000e+00> : vector<16x64xf32>
    %5 = tpu.matmul %3, %4, %cst {dimension_numbers = #tpu.dot_dimension_numbers<[1], [1], [0], [0], [0, 0, 1, 0], [], []>} : vector<16x32xf32>, vector<64x32xf32>, vector<16x64xf32> -> vector<16x64xf32>
    %c0_4 = arith.constant 0 : index
    %c0_5 = arith.constant 0 : index
    %6 = vector.load %arg8[%c0_4, %c0_5] : memref<1x64xf32, #tpu.memory_space<vmem>>, vector<1x64xf32>
    %7 = vector.broadcast %6 : vector<1x64xf32> to vector<16x64xf32>
    %8 = arith.addf %5, %7 : vector<16x64xf32>
    %c0_6 = arith.constant 0 : index
    %c0_7 = arith.constant 0 : index
    %9 = vector.load %arg9[%c0_6, %c0_7] : memref<16x64xf32, #tpu.memory_space<vmem>>, vector<16x64xf32>
    tpu.vector_store %arg9[%c0_6, %c0_7], %8 {strides = array<i32>} : memref<16x64xf32, #tpu.memory_space<vmem>>, vector<16x64xf32>,
    return
  }
  func.func @transform_0(%arg0: i32, %arg1: i32) -> (i32, i32) {
    %c0_i32 = arith.constant 0 : i32
    %c0_i32_0 = arith.constant 0 : i32
    return %arg0, %c0_i32 : i32, i32
  }
  func.func @transform_1(%arg0: i32, %arg1: i32) -> (i32, i32) {
    %c0_i32 = arith.constant 0 : i32
    %c0_i32_0 = arith.constant 0 : i32
    %c0_i32_1 = arith.constant 0 : i32
    return %c0_i32, %c0_i32_0 : i32, i32
  }
  func.func @transform_2(%arg0: i32, %arg1: i32) -> (i32, i32) {
    %c0_i32 = arith.constant 0 : i32
    %c0_i32_0 = arith.constant 0 : i32
    %c0_i32_1 = arith.constant 0 : i32
    return %c0_i32, %c0_i32_0 : i32, i32
  }
  func.func @transform_3(%arg0: i32, %arg1: i32) -> (i32, i32) {
    %c0_i32 = arith.constant 0 : i32
    %c0_i32_0 = arith.constant 0 : i32
    %c0_i32_1 = arith.constant 0 : i32
    return %c0_i32, %c0_i32_0 : i32, i32
  }
  func.func @transform_4(%arg0: i32, %arg1: i32) -> (i32, i32) {
    %c0_i32 = arith.constant 0 : i32
    %c0_i32_0 = arith.constant 0 : i32
    %c0_i32_1 = arith.constant 0 : i32
    return %c0_i32, %c0_i32_0 : i32, i32
  }
  func.func @transform_5(%arg0: i32, %arg1: i32) -> (i32, i32) {
    %c0_i32 = arith.constant 0 : i32
    %c0_i32_0 = arith.constant 0 : i32
    return %arg1, %c0_i32 : i32, i32
  }
  func.func @transform_6(%arg0: i32, %arg1: i32) -> (i32, i32) {
    %c0_i32 = arith.constant 0 : i32
    %c0_i32_0 = arith.constant 0 : i32
    return %c0_i32, %arg1 : i32, i32
  }
  func.func @transform_7(%arg0: i32, %arg1: i32) -> (i32, i32) {
    %c0_i32 = arith.constant 0 : i32
    return %arg0, %arg1 : i32, i32
  }
}

</mosaic_0001>

<llo_original>
// kernel: tpu_custom_call.1
$region0: #{tpu_custom_call.1}
  #allocation0 [shape = 'u32[]', space=smem, size = 0x4, offset = 0x4, fixed_abs, tag = 'smem constant byte address 0x4 - core index']
  #allocation1 [shape = 'u32[144,128]{1,0:T(1,128)}', space=vmem, size = 0x12000, scoped, tag = 'internal scratch']
  #allocation2 [shape = 'f32[16,32]{1,0:T(8,128)}', space=vmem, size = 0x2000, scoped, tag = 'scratch operand']
  %s0 = inlined_call_operand.vmem [shape: f32[16,32], index: 0, kind: input, shape index: {}]
  %s1 = inlined_call_operand.vmem [shape: f32[32,32], index: 1, kind: input, shape index: {}]
  %s2 = inlined_call_operand.vmem [shape: f32[1,32], index: 2, kind: input, shape index: {}]
  %s3 = inlined_call_operand.vmem [shape: f32[1,32], index: 3, kind: input, shape index: {}]
  %s4 = inlined_call_operand.vmem [shape: f32[1,32], index: 4, kind: input, shape index: {}]
  %s5 = inlined_call_operand.vmem [shape: f32[64,32], index: 5, kind: input, shape index: {}]
  %s6 = inlined_call_operand.vmem [shape: f32[1,64], index: 6, kind: input, shape index: {}]
  %s7 = inlined_call_operand.hbm [shape: f32[16,64], index: 7, kind: output, shape index: {}]
  %s8 = sld [smem:[#allocation0]]
  $region42: #{tpu_custom_call.1} parent=0
    _
  %s10 = ssub.s32 1, %s8
  %s11 = scalar_select 0, %s10, %s8
  $region1: #{tpu_custom_call.1} parent=0
    #allocation3 [shape = 'u8[8192]{0}', space=vmem, size = 0x2000, scoped, tag = 'output window, operand 0, single buffered']
    #allocation4 [shape = 's32[1]{0}', space=sflag, size = 0x4, scoped, tag = 'scoped memory for tpu_custom_call.1']
    %12 = vsyncpa [#allocation4], 0
    // Predicated region
    $region2: #{tpu_custom_call.1} parent=1 // pred_check
      _
    $region3: #{tpu_custom_call.1} parent=1 // pred_check_branch
      %14 = sbr.rel (0) target = $region5
    $region4: #{tpu_custom_call.1} parent=1 // pred_region
      _
    $region5: #{tpu_custom_call.1} parent=1 // pred_fallthru
      _
    // Predicated region
    $region6: #{tpu_custom_call.1} parent=1 // pred_check
      _
    $region7: #{tpu_custom_call.1} parent=1 // pred_check_branch
      %16 = sbr.rel (0) target = $region9
    $region8: #{tpu_custom_call.1} parent=1 // pred_region
      _
    $region9: #{tpu_custom_call.1} parent=1 // pred_fallthru
      _
    // Predicated region
    $region10: #{tpu_custom_call.1} parent=1 // pred_check
      _
    $region11: #{tpu_custom_call.1} parent=1 // pred_check_branch
      %18 = sbr.rel (0) target = $region13
    $region12: #{tpu_custom_call.1} parent=1 // pred_region
      _
    $region13: #{tpu_custom_call.1} parent=1 // pred_fallthru
      _
    // Predicated region
    $region14: #{tpu_custom_call.1} parent=1 // pred_check
      _
    $region15: #{tpu_custom_call.1} parent=1 // pred_check_branch
      %20 = sbr.rel (0) target = $region17
    $region16: #{tpu_custom_call.1} parent=1 // pred_region
      _
    $region17: #{tpu_custom_call.1} parent=1 // pred_fallthru
      _
    // Predicated region
    $region18: #{tpu_custom_call.1} parent=1 // pred_check
      _
    $region19: #{tpu_custom_call.1} parent=1 // pred_check_branch
      %22 = sbr.rel (0) target = $region21
    $region20: #{tpu_custom_call.1} parent=1 // pred_region
      _
    $region21: #{tpu_custom_call.1} parent=1 // pred_fallthru
      _
    // Predicated region
    $region22: #{tpu_custom_call.1} parent=1 // pred_check
      _
    $region23: #{tpu_custom_call.1} parent=1 // pred_check_branch
      %24 = sbr.rel (0) target = $region25
    $region24: #{tpu_custom_call.1} parent=1 // pred_region
      _
    $region25: #{tpu_custom_call.1} parent=1 // pred_fallthru
      _
    // Predicated region
    $region26: #{tpu_custom_call.1} parent=1 // pred_check
      _
    $region27: #{tpu_custom_call.1} parent=1 // pred_check_branch
      %26 = sbr.rel (0) target = $region29
    $region28: #{tpu_custom_call.1} parent=1 // pred_region
      _
    $region29: #{tpu_custom_call.1} parent=1 // pred_fallthru
      _
    %p27 = scmp.eq.s32.totalorder 0, 0
    // Predicated region
    $region30: #{tpu_custom_call.1} parent=1 // pred_check
      %p28 = pneg %p27
    $region31: #{tpu_custom_call.1} parent=1 // pred_check_branch
      %30 = sbr.rel (%p28) target = $region33
    $region32: #{tpu_custom_call.1} parent=1 // pred_region
      %v31 = vld [vmem:[%s0] sm:$0xff]
      %v32 = vld [vmem:[%s0 + $0x8] sm:$0xff]
      %v33 = vld [vmem:[%s1] sm:$0xff]
      %v34 = vld [vmem:[%s1 + $0x8] sm:$0xff]
      %v35 = vld [vmem:[%s1 + $0x10] sm:$0xff]
      %v36 = vld [vmem:[%s1 + $0x18] sm:$0xff]
      %v37 = vld [vmem:[%s2] sm:$0x1]
      %v39 = vlaneseq
      %v40 = vshrl.u32 %v39, 7
      %v41 = vsub.s32 0, %v40
      %v42 = vrot.slane %v37, %v41
      %vm44 = vcmask 261120
      %v46 = vsel %vm44, %v31, 0
      %v49 = vsel %vm44, %v32, 0
      %v52 = vsel %vm44, %v33, 0
      %v55 = vsel %vm44, %v34, 0
      %v58 = vsel %vm44, %v35, 0
      %v61 = vsel %vm44, %v36, 0
      %63 = vmatprep.subr.mxu0 0.0
      %64 = vmatpush1.xpose.msra.mxu0 %v52
      %65 = vmatprep.subr.mxu0 0.0
      %66 = vmatpush1.xpose.msra.mxu0 %v55
      %67 = vmatprep.subr.mxu0 0.0
      %68 = vmatpush1.xpose.msra.mxu0 %v58
      %69 = vmatprep.subr.mxu0 0.0
      %70 = vmatpush1.xpose.msra.mxu0 %v61
      %71 = vmatprep.subr.mxu0 0.0
      %72 = vmatpush1.xpose.msra.mxu0 0.0
      %73 = vmatprep.subr.mxu0 0.0
      %74 = vmatpush1.xpose.msra.mxu0 0.0
      %75 = vmatprep.subr.mxu0 0.0
      %76 = vmatpush1.xpose.msra.mxu0 0.0
      %77 = vmatprep.subr.mxu0 0.0
      %78 = vmatpush1.xpose.msra.mxu0 0.0
      %79 = vmatprep.subr.mxu0 0.0
      %80 = vmatpush1.xpose.msra.mxu0 0.0
      %81 = vmatprep.subr.mxu0 0.0
      %82 = vmatpush1.xpose.msra.mxu0 0.0
      %83 = vmatprep.subr.mxu0 0.0
      %84 = vmatpush1.xpose.msra.mxu0 0.0
      %85 = vmatprep.subr.mxu0 0.0
      %86 = vmatpush1.xpose.msra.mxu0 0.0
      %87 = vmatprep.subr.mxu0 0.0
      %88 = vmatpush1.xpose.msra.mxu0 0.0
      %89 = vmatprep.subr.mxu0 0.0
      %90 = vmatpush1.xpose.msra.mxu0 0.0
      %91 = vmatprep.subr.mxu0 0.0
      %92 = vmatpush1.xpose.msra.mxu0 0.0
      %93 = vmatprep.subr.mxu0 0.0
      %94 = vmatpush1.xpose.msra.mxu0 0.0
      %95 = vmatprep.subr.mxu0 0.0
      %96 = vmatpush1.xpose.msra.mxu0 0.0
      %97 = vmatprep.subr.mxu0 0.0
      %98 = vmatpush1.xpose.msra.mxu0 0.0
      %99 = vmatprep.subr.mxu0 0.0
      %100 = vmatpush1.xpose.msra.mxu0 0.0
      %101 = vmatprep.subr.mxu0 0.0
      %102 = vmatpush1.xpose.msra.mxu0 0.0
      %103 = vmatprep.subr.mxu0 0.0
      %104 = vmatpush1.xpose.msra.mxu0 0.0
      %105 = vmatprep.subr.mxu0 0.0
      %106 = vmatpush1.xpose.msra.mxu0 0.0
      %107 = vmatprep.subr.mxu0 0.0
      %108 = vmatpush1.xpose.msra.mxu0 0.0
      %109 = vmatprep.subr.mxu0 0.0
      %110 = vmatpush1.xpose.msra.mxu0 0.0
      %111 = vmatprep.subr.mxu0 0.0
      %112 = vmatpush1.xpose.msra.mxu0 0.0
      %113 = vmatprep.subr.mxu0 0.0
      %114 = vmatpush1.xpose.msra.mxu0 0.0
      %115 = vmatprep.subr.mxu0 0.0
      %116 = vmatpush1.xpose.msra.mxu0 0.0
      %117 = vmatprep.subr.mxu0 0.0
      %118 = vmatpush1.xpose.msra.mxu0 0.0
      %119 = vmatprep.subr.mxu0 0.0
      %120 = vmatpush1.xpose.msra.mxu0 0.0
      %121 = vmatprep.subr.mxu0 0.0
      %122 = vmatpush1.xpose.msra.mxu0 0.0
      %123 = vmatprep.subr.mxu0 0.0
      %124 = vmatpush1.xpose.msra.mxu0 0.0
      %125 = vmatprep.subr.mxu0 0.0
      %126 = vmatpush1.xpose.msra.mxu0 0.0
      %127 = vmatprep.mubr.f32.mxu0 0.0
      %128 = vmatmul.mubr.f32.gmra.mrb[0].mxu0 %v46
      %v129 = vpop.f32.mrb[0].mxu0
      %v130 = vadd.f32 %v42, %v129
      %v131 = vpop.f32.mrb[0].mxu0
      %132 = vmatprep.mubr.f32.mxu0 0.0
      %133 = vmatmul.mubr.f32.gmra.mrb[0].mxu0 %v49
      %v134 = vpop.f32.mrb[0].mxu0
      %v135 = vadd.f32 %v42, %v134
      %v136 = vpop.f32.mrb[0].mxu0
      %137 = vdwg.mxu0
      %v138 = vmul.f32 %v130, 0.5
      %v139 = vmul.f32 %v135, 0.5
      %v140 = vmul.f32 %v130, 0.70710677
      %v141 = vmul.f32 %v135, 0.70710677
      %v142 = verf.f32.pop %v140
      %v143 = verf.f32.pop %v141
      %v144 = vadd.f32 %v142, 1.0
      %v145 = vadd.f32 %v143, 1.0
      %v146 = vmul.f32 %v138, %v144
      %v147 = vmul.f32 %v139, %v145
      %v148 = vsel %vm44, %v146, 0.0
      %149 = vadd.xlane.f32.xlu0 %v148
      %v150 = vpop.xlane.xlu0 %149
      %v151 = vsel %vm44, %v147, 0.0
      %152 = vadd.xlane.f32.xlu0 %v151
      %v153 = vpop.xlane.xlu0 %152
      %v154 = vrcp.pop 32.0
      %v155 = vmul.f32 %v150, %v154
      %v156 = vmul.f32 %v153, %v154
      %v157 = vsub.f32 %v146, %v155
      %v158 = vsub.f32 %v147, %v156
      %v159 = vmul.f32 %v157, %v157
      %v160 = vmul.f32 %v158, %v158
      %v161 = vsel %vm44, %v159, 0.0
      %162 = vadd.xlane.f32.xlu0 %v161
      %v163 = vpop.xlane.xlu0 %162
      %v164 = vsel %vm44, %v160, 0.0
      %165 = vadd.xlane.f32.xlu0 %v164
      %v166 = vpop.xlane.xlu0 %165
      %v167 = vmul.f32 %v163, %v154
      %v168 = vmul.f32 %v166, %v154
      %v169 = vadd.f32 %v167, 1e-12
      %v170 = vadd.f32 %v168, 1e-12
      %v171 = vrsqrt.pop %v169
      %v172 = vrsqrt.pop %v170
      %v173 = vmul.f32 %v157, %v171
      %v174 = vmul.f32 %v158, %v172
      %v175 = vld [vmem:[%s3] sm:$0x1]
      %v177 = vlaneseq
      %v178 = vshrl.u32 %v177, 7
      %v179 = vsub.s32 0, %v178
      %v180 = vrot.slane %v175, %v179
      %v182 = vmul.f32 %v173, %v180
      %v183 = vmul.f32 %v174, %v180
      %v184 = vld [vmem:[%s4] sm:$0x1]
      %v186 = vlaneseq
      %v187 = vshrl.u32 %v186, 7
      %v188 = vsub.s32 0, %v187
      %v189 = vrot.slane %v184, %v188
      %v191 = vadd.f32 %v182, %v189
      %v192 = vadd.f32 %v183, %v189
      %193 = vst.msk [vmem:[#allocation2] sm:$0xff] %vm44, %v191
      %194 = vst.msk [vmem:[#allocation2 + $0x8] sm:$0xff] %vm44, %v192
    $region33: #{tpu_custom_call.1} parent=1 // pred_fallthru
      _
    %v195 = vld [vmem:[#allocation2] sm:$0xff]
    %v196 = vld [vmem:[#allocation2 + $0x8] sm:$0xff]
    %v197 = vld [vmem:[%s5] sm:$0xff]
    %v198 = vld [vmem:[%s5 + $0x8] sm:$0xff]
    %v199 = vld [vmem:[%s5 + $0x10] sm:$0xff]
    %v200 = vld [vmem:[%s5 + $0x18] sm:$0xff]
    %v201 = vld [vmem:[%s5 + $0x20] sm:$0xff]
    %v202 = vld [vmem:[%s5 + $0x28] sm:$0xff]
    %v203 = vld [vmem:[%s5 + $0x30] sm:$0xff]
    %v204 = vld [vmem:[%s5 + $0x38] sm:$0xff]
    %v205 = vld [vmem:[%s6] sm:$0x1]
    %v207 = vlaneseq
    %v208 = vshrl.u32 %v207, 7
    %v209 = vsub.s32 0, %v208
    %v210 = vrot.slane %v205, %v209
    %vm212 = vcmask 261120
    %v214 = vsel %vm212, %v195, 0
    %v217 = vsel %vm212, %v196, 0
    %v220 = vsel %vm212, %v197, 0
    %v223 = vsel %vm212, %v198, 0
    %v226 = vsel %vm212, %v199, 0
    %v229 = vsel %vm212, %v200, 0
    %v232 = vsel %vm212, %v201, 0
    %v235 = vsel %vm212, %v202, 0
    %v238 = vsel %vm212, %v203, 0
    %v241 = vsel %vm212, %v204, 0
    %243 = vmatprep.subr.mxu0 0.0
    %244 = vmatpush1.xpose.msra.mxu0 %v220
    %245 = vmatprep.subr.mxu0 0.0
    %246 = vmatpush1.xpose.msra.mxu0 %v223
    %247 = vmatprep.subr.mxu0 0.0
    %248 = vmatpush1.xpose.msra.mxu0 %v226
    %249 = vmatprep.subr.mxu0 0.0
    %250 = vmatpush1.xpose.msra.mxu0 %v229
    %251 = vmatprep.subr.mxu0 0.0
    %252 = vmatpush1.xpose.msra.mxu0 %v232
    %253 = vmatprep.subr.mxu0 0.0
    %254 = vmatpush1.xpose.msra.mxu0 %v235
    %255 = vmatprep.subr.mxu0 0.0
    %256 = vmatpush1.xpose.msra.mxu0 %v238
    %257 = vmatprep.subr.mxu0 0.0
    %258 = vmatpush1.xpose.msra.mxu0 %v241
    %259 = vmatprep.subr.mxu0 0.0
    %260 = vmatpush1.xpose.msra.mxu0 0.0
    %261 = vmatprep.subr.mxu0 0.0
    %262 = vmatpush1.xpose.msra.mxu0 0.0
    %263 = vmatprep.subr.mxu0 0.0
    %264 = vmatpush1.xpose.msra.mxu0 0.0
    %265 = vmatprep.subr.mxu0 0.0
    %266 = vmatpush1.xpose.msra.mxu0 0.0
    %267 = vmatprep.subr.mxu0 0.0
    %268 = vmatpush1.xpose.msra.mxu0 0.0
    %269 = vmatprep.subr.mxu0 0.0
    %270 = vmatpush1.xpose.msra.mxu0 0.0
    %271 = vmatprep.subr.mxu0 0.0
    %272 = vmatpush1.xpose.msra.mxu0 0.0
    %273 = vmatprep.subr.mxu0 0.0
    %274 = vmatpush1.xpose.msra.mxu0 0.0
    %275 = vmatprep.subr.mxu0 0.0
    %276 = vmatpush1.xpose.msra.mxu0 0.0
    %277 = vmatprep.subr.mxu0 0.0
    %278 = vmatpush1.xpose.msra.mxu0 0.0
    %279 = vmatprep.subr.mxu0 0.0
    %280 = vmatpush1.xpose.msra.mxu0 0.0
    %281 = vmatprep.subr.mxu0 0.0
    %282 = vmatpush1.xpose.msra.mxu0 0.0
    %283 = vmatprep.subr.mxu0 0.0
    %284 = vmatpush1.xpose.msra.mxu0 0.0
    %285 = vmatprep.subr.mxu0 0.0
    %286 = vmatpush1.xpose.msra.mxu0 0.0
    %287 = vmatprep.subr.mxu0 0.0
    %288 = vmatpush1.xpose.msra.mxu0 0.0
    %289 = vmatprep.subr.mxu0 0.0
    %290 = vmatpush1.xpose.msra.mxu0 0.0
    %291 = vmatprep.subr.mxu0 0.0
    %292 = vmatpush1.xpose.msra.mxu0 0.0
    %293 = vmatprep.subr.mxu0 0.0
    %294 = vmatpush1.xpose.msra.mxu0 0.0
    %295 = vmatprep.subr.mxu0 0.0
    %296 = vmatpush1.xpose.msra.mxu0 0.0
    %297 = vmatprep.subr.mxu0 0.0
    %298 = vmatpush1.xpose.msra.mxu0 0.0
    %299 = vmatprep.subr.mxu0 0.0
    %300 = vmatpush1.xpose.msra.mxu0 0.0
    %301 = vmatprep.subr.mxu0 0.0
    %302 = vmatpush1.xpose.msra.mxu0 0.0
    %303 = vmatprep.subr.mxu0 0.0
    %304 = vmatpush1.xpose.msra.mxu0 0.0
    %305 = vmatprep.subr.mxu0 0.0
    %306 = vmatpush1.xpose.msra.mxu0 0.0
    %307 = vmatprep.mubr.f32.mxu0 0.0
    %308 = vmatmul.mubr.f32.gmra.mrb[0].mxu0 %v214
    %v309 = vpop.f32.mrb[0].mxu0
    %v310 = vadd.f32 %v210, %v309
    %v311 = vpop.f32.mrb[0].mxu0
    %312 = vmatprep.mubr.f32.mxu0 0.0
    %313 = vmatmul.mubr.f32.gmra.mrb[0].mxu0 %v217
    %v314 = vpop.f32.mrb[0].mxu0
    %v315 = vadd.f32 %v210, %v314
    %v316 = vpop.f32.mrb[0].mxu0
    %317 = vdwg.mxu0
    %vm318 = vcmask 523264
    %319 = vst.msk [vmem:[#allocation3] sm:$0xff] %vm318, %v310
    %320 = vst.msk [vmem:[#allocation3 + $0x8] sm:$0xff] %vm318, %v315
    // Predicated region
    $region34: #{tpu_custom_call.1} parent=1 // pred_check
      _
    $region35: #{tpu_custom_call.1} parent=1 // pred_check_branch
      %322 = sbr.rel (0) target = $region37
    $region36: #{tpu_custom_call.1} parent=1 // pred_region
      %s324 = ssub.s32 256, 256
      %325 = vsyncadd [#allocation4], %s324
      %s326 = sshll.u32 [#allocation3], 4
      %s327 = int_to_ptr.vmem [resolvable:$true] %s326
      %332 = dma.vmem_to_hbm [thread:$0]  %s327, 256, %s7, [#allocation4], 128, 128, 8
    $region37: #{tpu_custom_call.1} parent=1 // pred_fallthru
      _
    // Predicated region
    $region38: #{tpu_custom_call.1} parent=1 // pred_check
      _
    $region39: #{tpu_custom_call.1} parent=1 // pred_check_branch
      %334 = sbr.rel (0) target = $region41
    $region40: #{tpu_custom_call.1} parent=1 // pred_region
      %335 = dma.done [#allocation4], 256
    $region41: #{tpu_custom_call.1} parent=1 // pred_fallthru
      _
    %336 = vsyncpa [#allocation4], 1

</llo_original>
